<compile_context>
chip_gen: v7x
topology: tpu7x:2x2x1
jax: 0.10.0
libtpu: 0.0.40
codegen_flags: <defaults>
</compile_context>

<pallas_src>
import jax
import jax.numpy as jnp
from jax.experimental import pallas as pl
from jax.experimental.pallas import tpu as pltpu

HIDDEN_SIZE = 16
OUTPUT_SIZE = 7       # len(tgt_vocab) = {'<pad>','<sos>','<eos>','Je','suis','un','étudiant'}
LANE = 128            # TPU lane width
VOCAB_PAD = 8         # embedding rows padded to a sublane multiple
BATCH_PAD = 8         # f32 sublane count
STATE_LANES = 2 * LANE  # carried state = [h | c] packed along lanes


# ---------------------------------------------------------------------------
# Kernel: fused embedding + LSTM cell + Linear head, one step per grid index
# ---------------------------------------------------------------------------
def decoder_kernel(ids_ref, state0_ref, a_ref, whh_ref, wfc_ref, bfc_ref,
                   logits_ref, state_ref):
    """One decoder step per grid iteration t (grid = (T,)).

      ids_ref    (Bp, 1)    int32  token ids for step t
      state0_ref (Bp, 256)  f32    initial [h | c] (real lanes 0:16 / 128:144)
      a_ref      (Vp, 128)  f32    Embedding @ W_ih^T + (b_ih + b_hh), gate-packed
      whh_ref    (128, 128) bf16   W_hh^T, gate-packed, rows >= 16 zero
      wfc_ref    (128, 128) bf16   fc.weight^T, real block [:16, :7]
      bfc_ref    (1, 128)   f32    fc.bias, real [:7]
      logits_ref (Bp, 128)  f32    step-t logits (real [:, :7]), new block per t
      state_ref  (Bp, 256)  f32    carried [h | c]; constant block index =>
                                   VMEM-resident across all T steps, one HBM
                                   writeback at the end.

    Gate packing along the 128-lane gate axis (PyTorch order i, f, g, o):
      i @ [0:16)    f @ [16:32) and [112:128)
      g @ [32:48) and [96:112)    o @ [48:64) and [80:96)
    The f/g/o mirrors make the pltpu.roll extraction below independent of the
    hardware rotate direction.  Lanes that hold no gate are zero in a/whh, so
    garbage in lanes >= 16 of h/c never reaches the real lanes (whh/wfc rows
    >= 16 are zero and the c recurrence is purely elementwise).
    """
    H = HIDDEN_SIZE
    t = pl.program_id(0)

    # Load the initial state into the carried output block on the first step.
    @pl.when(t == 0)
    def _():
        state_ref[...] = state0_ref[...]

    h = state_ref[:, :LANE]                          # (Bp, 128) f32
    c = state_ref[:, LANE:STATE_LANES]               # (Bp, 128) f32

    # Embedding gather fused into the input projection: one-hot(ids) @ a is
    # "emb lookup + x @ W_ih^T + bias" in a single tiny MXU op.
    ids = ids_ref[...]                               # (Bp, 1) int32
    onehot = (jax.lax.broadcasted_iota(jnp.int32, (BATCH_PAD, VOCAB_PAD), 1)
              == ids).astype(jnp.float32)            # (Bp, Vp)

    gates = (jnp.dot(onehot, a_ref[...], preferred_element_type=jnp.float32)
             + jnp.dot(h.astype(jnp.bfloat16), whh_ref[...],
                       preferred_element_type=jnp.float32))        # (Bp, 128)

    # tanh on the two g stripes, sigmoid everywhere else (one lane mask).
    lane = jax.lax.broadcasted_iota(jnp.int32, gates.shape, 1)
    is_g = (((lane >= 2 * H) & (lane < 3 * H))
            | ((lane >= LANE - 2 * H) & (lane < LANE - H)))
    act = jnp.where(is_g, jnp.tanh(gates), jax.nn.sigmoid(gates))

    # Lane rotations (XLU) bring f/g/o onto lanes [0:16); i is already there.
    # Thanks to the mirrored packing, either rotate direction lands the right
    # gate on lanes [0:16).
    i_g = act
    f_g = pltpu.roll(act, shift=H, axis=1)
    g_g = pltpu.roll(act, shift=2 * H, axis=1)
    o_g = pltpu.roll(act, shift=3 * H, axis=1)

    c_new = f_g * c + i_g * g_g                      # real data in lanes [0:16)
    h_new = o_g * jnp.tanh(c_new)

    state_ref[:, :LANE] = h_new
    state_ref[:, LANE:STATE_LANES] = c_new

    logits_ref[...] = (jnp.dot(h_new.astype(jnp.bfloat16), wfc_ref[...],
                               preferred_element_type=jnp.float32)
                       + bfc_ref[...])


def _decode_call(ids_p, state0_p, packed):
    """ids_p (T, Bp, 1) int32; state0_p (Bp, 256) f32; packed weight dict."""
    T = ids_p.shape[0]
    const2d = lambda t: (0, 0)
    grid_spec = pltpu.PrefetchScalarGridSpec(
        num_scalar_prefetch=0,
        grid=(T,),
        in_specs=[
            pl.BlockSpec((None, BATCH_PAD, 1), lambda t: (t, 0, 0)),   # ids (per step)
            pl.BlockSpec((BATCH_PAD, STATE_LANES), const2d),           # initial state
            pl.BlockSpec((VOCAB_PAD, LANE), const2d),                  # a   (resident)
            pl.BlockSpec((LANE, LANE), const2d),                       # whh (resident)
            pl.BlockSpec((LANE, LANE), const2d),                       # wfc (resident)
            pl.BlockSpec((1, LANE), const2d),                          # bfc (resident)
        ],
        out_specs=(
            pl.BlockSpec((None, BATCH_PAD, LANE), lambda t: (t, 0, 0)),  # per-step logits
            pl.BlockSpec((BATCH_PAD, STATE_LANES), const2d),             # final state
        ),
    )
    return pl.pallas_call(
        decoder_kernel,
        grid_spec=grid_spec,
        out_shape=(jax.ShapeDtypeStruct((T, BATCH_PAD, LANE), jnp.float32),
                   jax.ShapeDtypeStruct((BATCH_PAD, STATE_LANES), jnp.float32)),
        input_output_aliases={1: 1},   # state0 HBM buffer reused for the state output
        compiler_params=pltpu.CompilerParams(
            dimension_semantics=("arbitrary",),   # time loop carries state
            vmem_limit_bytes=4 * 1024 * 1024),
    )(ids_p, state0_p, packed["a"], packed["whh"], packed["wfc"], packed["bfc"])


# ---------------------------------------------------------------------------
# Parameters (PyTorch canonical layout) and one-time lane-aligned repack
# ---------------------------------------------------------------------------
def init_params(key, output_size=OUTPUT_SIZE, hidden_size=HIDDEN_SIZE):
    ks = jax.random.split(key, 7)
    s = 0.1
    H = hidden_size
    return {
        "emb_w": jax.random.normal(ks[0], (output_size, H), jnp.float32) * s,  # Embedding.weight
        "w_ih":  jax.random.normal(ks[1], (4 * H, H), jnp.float32) * s,        # lstm.weight_ih_l0
        "w_hh":  jax.random.normal(ks[2], (4 * H, H), jnp.float32) * s,        # lstm.weight_hh_l0
        "b_ih":  jax.random.normal(ks[3], (4 * H,), jnp.float32) * s,
        "b_hh":  jax.random.normal(ks[4], (4 * H,), jnp.float32) * s,
        "fc_w":  jax.random.normal(ks[5], (output_size, H), jnp.float32) * s,  # fc.weight
        "fc_b":  jax.random.normal(ks[6], (output_size,), jnp.float32) * s,
    }


def pack_decoder_params(params):
    """One-time repack of PyTorch-layout weights into the kernel layout.

    * a   : (Vp, 128) f32, row v = emb[v] @ W_ih^T + b_ih + b_hh, gate-packed.
    * whh : (128, 128) bf16, rows [:16] = W_hh^T gate-packed, rest zero.
    * wfc : (128, 128) bf16, block [:16, :7] = fc.weight^T, rest zero.
    * bfc : (1, 128) f32, [:7] = fc.bias.
    Gate columns (i, f, g, o) land at lane offsets 0 / 16 / 32 / 48 and the
    f, g, o blocks are mirrored at 112 / 96 / 80 (roll-direction agnostic).
    """
    H, V = HIDDEN_SIZE, OUTPUT_SIZE
    hp = jax.lax.Precision.HIGHEST

    e_ih = jnp.dot(params["emb_w"], params["w_ih"].T, precision=hp)   # (V, 4H) [i|f|g|o]
    bias = params["b_ih"] + params["b_hh"]                            # (4H,)
    a_rows = e_ih + bias[None, :]                                     # bias folded
    w_hh_t = params["w_hh"].T                                         # (H, 4H)

    # gate index -> destination lane offsets (primary + mirror)
    gate_dst = {0: (0,),                       # i
                1: (H, LANE - H),              # f
                2: (2 * H, LANE - 2 * H),      # g
                3: (3 * H, LANE - 3 * H)}      # o

    a_p = jnp.zeros((VOCAB_PAD, LANE), jnp.float32)
    whh_p = jnp.zeros((LANE, LANE), jnp.float32)
    for k, dsts in gate_dst.items():
        for d in dsts:
            a_p = a_p.at[:V, d:d + H].set(a_rows[:, k * H:(k + 1) * H])
            whh_p = whh_p.at[:H, d:d + H].set(w_hh_t[:, k * H:(k + 1) * H])

    wfc_p = jnp.zeros((LANE, LANE), jnp.float32).at[:H, :V].set(params["fc_w"].T)
    bfc_p = jnp.zeros((1, LANE), jnp.float32).at[0, :V].set(params["fc_b"])

    return {"a": a_p,                                # f32: exact embedding+bias path
            "whh": whh_p.astype(jnp.bfloat16),       # bf16 MXU operand
            "wfc": wfc_p.astype(jnp.bfloat16),       # bf16 MXU operand
            "bfc": bfc_p}


# ---------------------------------------------------------------------------
# Decoder.forward equivalent (single step) and fused multi-step decode
# ---------------------------------------------------------------------------
def _decode_padded(packed, ids_seq, hidden, cell):
    """ids_seq (T, B) int32; hidden/cell (1, B, H) (PyTorch LSTM state layout).
    Applies Decoder.forward once per time step inside ONE pallas_call.
    Returns (predictions (T, B, V), hidden (1, B, H), cell (1, B, H))."""
    T, B = ids_seq.shape
    H = HIDDEN_SIZE

    ids_p = jnp.zeros((T, BATCH_PAD, 1), jnp.int32).at[:, :B, 0].set(
        ids_seq.astype(jnp.int32))
    state0 = (jnp.zeros((BATCH_PAD, STATE_LANES), jnp.float32)
              .at[:B, :H].set(hidden[0])
              .at[:B, LANE:LANE + H].set(cell[0]))

    logits_p, state_p = _decode_call(ids_p, state0, packed)

    preds = logits_p[:, :B, :OUTPUT_SIZE]
    hidden_new = state_p[:B, :H][None]
    cell_new = state_p[:B, LANE:LANE + H][None]
    return preds, hidden_new, cell_new


decoder_decode = jax.jit(_decode_padded)            # fused T-step decode


@jax.jit
def decoder_forward(packed, input_ids, hidden, cell):
    """Exact Decoder.forward: input_ids (B,), hidden/cell (1, B, H).
    Returns (prediction (B, V), hidden (1, B, H), cell (1, B, H))."""
    preds, hidden_new, cell_new = _decode_padded(packed, input_ids[None, :],
                                                 hidden, cell)
    return preds[0], hidden_new, cell_new


# ---------------------------------------------------------------------------
# Pure-JAX reference (mirrors the PyTorch module exactly) for verification
# ---------------------------------------------------------------------------
def decoder_reference(params, input_ids, hidden, cell):
    H = HIDDEN_SIZE
    hp = jax.lax.Precision.HIGHEST
    x = params["emb_w"][input_ids]                    # (B, H) embedding lookup
    h, c = hidden[0], cell[0]
    gates = (jnp.dot(x, params["w_ih"].T, precision=hp)
             + jnp.dot(h, params["w_hh"].T, precision=hp)
             + params["b_ih"] + params["b_hh"])
    i = jax.nn.sigmoid(gates[:, 0 * H:1 * H])
    f = jax.nn.sigmoid(gates[:, 1 * H:2 * H])
    g = jnp.tanh(gates[:, 2 * H:3 * H])
    o = jax.nn.sigmoid(gates[:, 3 * H:4 * H])
    c_new = f * c + i * g
    h_new = o * jnp.tanh(c_new)
    pred = jnp.dot(h_new, params["fc_w"].T, precision=hp) + params["fc_b"]
    return pred, h_new[None], c_new[None]


def decode_reference(params, ids_seq, hidden, cell):
    preds = []
    h, c = hidden, cell
    for t in range(ids_seq.shape[0]):
        p, h, c = decoder_reference(params, ids_seq[t], h, c)
        preds.append(p)
    return jnp.stack(preds), h, c


# ---------------------------------------------------------------------------
if __name__ == "__main__":
    key = jax.random.PRNGKey(0)
    params = init_params(key)
    packed = pack_decoder_params(params)

    batch = 2
    kid, kh, kc, kseq = jax.random.split(jax.random.PRNGKey(0), 4)
    input_ids = jax.random.randint(kid, (batch,), 0, OUTPUT_SIZE, dtype=jnp.int32)
    hidden = jax.random.normal(kh, (1, batch, HIDDEN_SIZE), jnp.float32) * 0.1
    cell = jax.random.normal(kc, (1, batch, HIDDEN_SIZE), jnp.float32) * 0.1

    # bf16 MXU weights (whh / wfc) -> slightly looser tolerance than pure f32.
    TOL = dict(atol=1e-2, rtol=1e-2)

    # --- single step: exact Decoder.forward semantics (T == 1) --------------
    pred, h1, c1 = decoder_forward(packed, input_ids, hidden, cell)
    pred, h1, c1 = jax.block_until_ready((pred, h1, c1))
    assert pred.shape == (batch, OUTPUT_SIZE)
    assert h1.shape == (1, batch, HIDDEN_SIZE)
    assert c1.shape == (1, batch, HIDDEN_SIZE)

    pred_r, h_r, c_r = decoder_reference(params, input_ids, hidden, cell)
    assert bool(jnp.allclose(pred, pred_r, **TOL))
    assert bool(jnp.allclose(h1, h_r, **TOL))
    assert bool(jnp.allclose(c1, c_r, **TOL))

    # --- multi-step decode: the fused in-kernel time loop -------------------
    T = 6
    ids_seq = jax.random.randint(kseq, (T, batch), 0, OUTPUT_SIZE, dtype=jnp.int32)
    preds_seq, hT, cT = decoder_decode(packed, ids_seq, hidden, cell)
    preds_seq, hT, cT = jax.block_until_ready((preds_seq, hT, cT))
    assert preds_seq.shape == (T, batch, OUTPUT_SIZE)

    preds_ref, hT_r, cT_r = decode_reference(params, ids_seq, hidden, cell)
    assert bool(jnp.allclose(preds_seq, preds_ref, **TOL))
    assert bool(jnp.allclose(hT, hT_r, **TOL))
    assert bool(jnp.allclose(cT, cT_r, **TOL))

    print("KERNEL_OK")
</pallas_src>

<mosaic_0001>
module attributes {stable_mosaic.version = 11 : i64} {
  func.func @decoder_kernel(%arg0: i32, %arg1: memref<1x8x1xi32, #tpu.memory_space<vmem>>, %arg2: memref<8x256xf32, #tpu.memory_space<vmem>>, %arg3: memref<8x128xf32, #tpu.memory_space<vmem>>, %arg4: memref<128x128xbf16, #tpu.memory_space<vmem>>, %arg5: memref<128x128xbf16, #tpu.memory_space<vmem>>, %arg6: memref<1x128xf32, #tpu.memory_space<vmem>>, %arg7: memref<1x8x128xf32, #tpu.memory_space<vmem>>, %arg8: memref<8x256xf32, #tpu.memory_space<vmem>>) attributes {dimension_semantics = [#tpu.dimension_semantics<arbitrary>], iteration_bounds = array<i64: 1>, scalar_prefetch = 0 : i64, scratch_operands = 0 : i64, tpu.core_type = #tpu.core_type<tc>, window_params = [{transform_indices = @transform_0, window_bounds = array<i64: 1, 8, 1>}, {pipeline_mode = #tpu.pipeline_mode<synchronous>, transform_indices = @transform_1, window_bounds = array<i64: 8, 256>}, {pipeline_mode = #tpu.pipeline_mode<synchronous>, transform_indices = @transform_2, window_bounds = array<i64: 8, 128>}, {pipeline_mode = #tpu.pipeline_mode<synchronous>, transform_indices = @transform_3, window_bounds = array<i64: 128, 128>}, {pipeline_mode = #tpu.pipeline_mode<synchronous>, transform_indices = @transform_4, window_bounds = array<i64: 128, 128>}, {pipeline_mode = #tpu.pipeline_mode<synchronous>, transform_indices = @transform_5, window_bounds = array<i64: 1, 128>}, {transform_indices = @transform_6, window_bounds = array<i64: 1, 8, 128>}, {pipeline_mode = #tpu.pipeline_mode<synchronous>, transform_indices = @transform_7, window_bounds = array<i64: 8, 256>}]} {
    %c0_i32 = arith.constant 0 : i32
    %0 = arith.cmpi eq, %arg0, %c0_i32 : i32
    %1 = arith.extui %0 : i1 to i32
    %c0_i32_0 = arith.constant 0 : i32
    %2 = arith.cmpi ne, %1, %c0_i32_0 : i32
    scf.if %2 {
      %c0_26 = arith.constant 0 : index
      %c0_27 = arith.constant 0 : index
      %56 = vector.load %arg2[%c0_26, %c0_27] : memref<8x256xf32, #tpu.memory_space<vmem>>, vector<8x256xf32>
      %c0_28 = arith.constant 0 : index
      %c0_29 = arith.constant 0 : index
      %57 = vector.load %arg8[%c0_28, %c0_29] : memref<8x256xf32, #tpu.memory_space<vmem>>, vector<8x256xf32>
      tpu.vector_store %arg8[%c0_28, %c0_29], %56 {strides = array<i32>} : memref<8x256xf32, #tpu.memory_space<vmem>>, vector<8x256xf32>,
    } else {
    }
    %c0 = arith.constant 0 : index
    %c0_1 = arith.constant 0 : index
    %3 = vector.load %arg8[%c0, %c0_1] : memref<8x256xf32, #tpu.memory_space<vmem>>, vector<8x128xf32>
    %c0_2 = arith.constant 0 : index
    %c128 = arith.constant 128 : index
    %4 = vector.load %arg8[%c0_2, %c128] : memref<8x256xf32, #tpu.memory_space<vmem>>, vector<8x128xf32>
    %c0_3 = arith.constant 0 : index
    %c0_4 = arith.constant 0 : index
    %c0_5 = arith.constant 0 : index
    %5 = vector.load %arg1[%c0_3, %c0_4, %c0_5] : memref<1x8x1xi32, #tpu.memory_space<vmem>>, vector<1x8x1xi32>
    %6 = vector.shape_cast %5 : vector<1x8x1xi32> to vector<8x1xi32>
    %7 = tpu.iota {dimensions = array<i32: 1>} : vector<8x8xi32>
    %8 = vector.broadcast %6 : vector<8x1xi32> to vector<8x8xi32>
    %9 = arith.cmpi eq, %7, %8 : vector<8x8xi32>
    %10 = arith.extui %9 : vector<8x8xi1> to vector<8x8xi32>
    %11 = arith.sitofp %10 : vector<8x8xi32> to vector<8x8xf32>
    %c0_6 = arith.constant 0 : index
    %c0_7 = arith.constant 0 : index
    %12 = vector.load %arg3[%c0_6, %c0_7] : memref<8x128xf32, #tpu.memory_space<vmem>>, vector<8x128xf32>
    %cst = arith.constant dense<0.000000e+00> : vector<8x128xf32>
    %13 = tpu.matmul %11, %12, %cst {dimension_numbers = #tpu.dot_dimension_numbers<[1], [0], [0], [1], [0, 0, 1, 1], [], []>} : vector<8x8xf32>, vector<8x128xf32>, vector<8x128xf32> -> vector<8x128xf32>
    %14 = arith.truncf %3 : vector<8x128xf32> to vector<8x128xbf16>
    %c0_8 = arith.constant 0 : index
    %c0_9 = arith.constant 0 : index
    %15 = vector.load %arg4[%c0_8, %c0_9] : memref<128x128xbf16, #tpu.memory_space<vmem>>, vector<128x128xbf16>
    %cst_10 = arith.constant dense<0.000000e+00> : vector<8x128xf32>
    %16 = tpu.matmul %14, %15, %cst_10 {dimension_numbers = #tpu.dot_dimension_numbers<[1], [0], [0], [1], [0, 0, 1, 1], [], []>} : vector<8x128xbf16>, vector<128x128xbf16>, vector<8x128xf32> -> vector<8x128xf32>
    %17 = arith.addf %13, %16 : vector<8x128xf32>
    %18 = tpu.iota {dimensions = array<i32: 1>} : vector<8x128xi32>
    %c32_i32 = arith.constant 32 : i32
    %19 = vector.broadcast %c32_i32 : i32 to vector<8x128xi32>
    %20 = arith.cmpi sge, %18, %19 : vector<8x128xi32>
    %c48_i32 = arith.constant 48 : i32
    %21 = vector.broadcast %c48_i32 : i32 to vector<8x128xi32>
    %22 = arith.cmpi slt, %18, %21 : vector<8x128xi32>
    %23 = arith.andi %20, %22 : vector<8x128xi1>
    %c96_i32 = arith.constant 96 : i32
    %24 = vector.broadcast %c96_i32 : i32 to vector<8x128xi32>
    %25 = arith.cmpi sge, %18, %24 : vector<8x128xi32>
    %c112_i32 = arith.constant 112 : i32
    %26 = vector.broadcast %c112_i32 : i32 to vector<8x128xi32>
    %27 = arith.cmpi slt, %18, %26 : vector<8x128xi32>
    %28 = arith.andi %25, %27 : vector<8x128xi1>
    %29 = arith.ori %23, %28 : vector<8x128xi1>
    %30 = math.tanh %17 : vector<8x128xf32>
    %31 = arith.negf %17 : vector<8x128xf32>
    %32 = math.exp %31 : vector<8x128xf32>
    %cst_11 = arith.constant 1.000000e+00 : f32
    %33 = vector.broadcast %cst_11 : f32 to vector<8x128xf32>
    %34 = arith.addf %33, %32 : vector<8x128xf32>
    %35 = arith.divf %33, %34 : vector<8x128xf32>
    %36 = arith.select %29, %30, %35 : vector<8x128xi1>, vector<8x128xf32>
    %c16_i32 = arith.constant 16 : i32
    %37 = tpu.dynamic_rotate %36 by %c16_i32 dim 1 : vector<8x128xf32>, i32 -> vector<8x128xf32>
    %c32_i32_12 = arith.constant 32 : i32
    %38 = tpu.dynamic_rotate %36 by %c32_i32_12 dim 1 : vector<8x128xf32>, i32 -> vector<8x128xf32>
    %c48_i32_13 = arith.constant 48 : i32
    %39 = tpu.dynamic_rotate %36 by %c48_i32_13 dim 1 : vector<8x128xf32>, i32 -> vector<8x128xf32>
    %40 = arith.mulf %37, %4 : vector<8x128xf32>
    %41 = arith.mulf %36, %38 : vector<8x128xf32>
    %42 = arith.addf %40, %41 : vector<8x128xf32>
    %43 = math.tanh %42 : vector<8x128xf32>
    %44 = arith.mulf %39, %43 : vector<8x128xf32>
    %c0_14 = arith.constant 0 : index
    %c0_15 = arith.constant 0 : index
    %45 = vector.load %arg8[%c0_14, %c0_15] : memref<8x256xf32, #tpu.memory_space<vmem>>, vector<8x128xf32>
    tpu.vector_store %arg8[%c0_14, %c0_15], %44 {strides = array<i32>} : memref<8x256xf32, #tpu.memory_space<vmem>>, vector<8x128xf32>,
    %c0_16 = arith.constant 0 : index
    %c128_17 = arith.constant 128 : index
    %46 = vector.load %arg8[%c0_16, %c128_17] : memref<8x256xf32, #tpu.memory_space<vmem>>, vector<8x128xf32>
    tpu.vector_store %arg8[%c0_16, %c128_17], %42 {strides = array<i32>} : memref<8x256xf32, #tpu.memory_space<vmem>>, vector<8x128xf32>,
    %47 = arith.truncf %44 : vector<8x128xf32> to vector<8x128xbf16>
    %c0_18 = arith.constant 0 : index
    %c0_19 = arith.constant 0 : index
    %48 = vector.load %arg5[%c0_18, %c0_19] : memref<128x128xbf16, #tpu.memory_space<vmem>>, vector<128x128xbf16>
    %cst_20 = arith.constant dense<0.000000e+00> : vector<8x128xf32>
    %49 = tpu.matmul %47, %48, %cst_20 {dimension_numbers = #tpu.dot_dimension_numbers<[1], [0], [0], [1], [0, 0, 1, 1], [], []>} : vector<8x128xbf16>, vector<128x128xbf16>, vector<8x128xf32> -> vector<8x128xf32>
    %c0_21 = arith.constant 0 : index
    %c0_22 = arith.constant 0 : index
    %50 = vector.load %arg6[%c0_21, %c0_22] : memref<1x128xf32, #tpu.memory_space<vmem>>, vector<1x128xf32>
    %51 = vector.broadcast %50 : vector<1x128xf32> to vector<8x128xf32>
    %52 = arith.addf %49, %51 : vector<8x128xf32>
    %c0_23 = arith.constant 0 : index
    %c0_24 = arith.constant 0 : index
    %c0_25 = arith.constant 0 : index
    %53 = vector.load %arg7[%c0_23, %c0_24, %c0_25] : memref<1x8x128xf32, #tpu.memory_space<vmem>>, vector<1x8x128xf32>
    %54 = vector.shape_cast %53 : vector<1x8x128xf32> to vector<8x128xf32>
    %55 = vector.shape_cast %52 : vector<8x128xf32> to vector<1x8x128xf32>
    tpu.vector_store %arg7[%c0_23, %c0_24, %c0_25], %55 {strides = array<i32>} : memref<1x8x128xf32, #tpu.memory_space<vmem>>, vector<1x8x128xf32>,
    return
  }
  func.func @transform_0(%arg0: i32) -> (i32, i32, i32) {
    %c0_i32 = arith.constant 0 : i32
    %c0_i32_0 = arith.constant 0 : i32
    %c0_i32_1 = arith.constant 0 : i32
    return %arg0, %c0_i32, %c0_i32_0 : i32, i32, i32
  }
  func.func @transform_1(%arg0: i32) -> (i32, i32) {
    %c0_i32 = arith.constant 0 : i32
    %c0_i32_0 = arith.constant 0 : i32
    %c0_i32_1 = arith.constant 0 : i32
    return %c0_i32, %c0_i32_0 : i32, i32
  }
  func.func @transform_2(%arg0: i32) -> (i32, i32) {
    %c0_i32 = arith.constant 0 : i32
    %c0_i32_0 = arith.constant 0 : i32
    %c0_i32_1 = arith.constant 0 : i32
    return %c0_i32, %c0_i32_0 : i32, i32
  }
  func.func @transform_3(%arg0: i32) -> (i32, i32) {
    %c0_i32 = arith.constant 0 : i32
    %c0_i32_0 = arith.constant 0 : i32
    %c0_i32_1 = arith.constant 0 : i32
    return %c0_i32, %c0_i32_0 : i32, i32
  }
  func.func @transform_4(%arg0: i32) -> (i32, i32) {
    %c0_i32 = arith.constant 0 : i32
    %c0_i32_0 = arith.constant 0 : i32
    %c0_i32_1 = arith.constant 0 : i32
    return %c0_i32, %c0_i32_0 : i32, i32
  }
  func.func @transform_5(%arg0: i32) -> (i32, i32) {
    %c0_i32 = arith.constant 0 : i32
    %c0_i32_0 = arith.constant 0 : i32
    %c0_i32_1 = arith.constant 0 : i32
    return %c0_i32, %c0_i32_0 : i32, i32
  }
  func.func @transform_6(%arg0: i32) -> (i32, i32, i32) {
    %c0_i32 = arith.constant 0 : i32
    %c0_i32_0 = arith.constant 0 : i32
    %c0_i32_1 = arith.constant 0 : i32
    return %arg0, %c0_i32, %c0_i32_0 : i32, i32, i32
  }
  func.func @transform_7(%arg0: i32) -> (i32, i32) {
    %c0_i32 = arith.constant 0 : i32
    %c0_i32_0 = arith.constant 0 : i32
    %c0_i32_1 = arith.constant 0 : i32
    return %c0_i32, %c0_i32_0 : i32, i32
  }
}

</mosaic_0001>

<llo_original>
// kernel: decoder_forward.1
$region0: #{decoder_forward.1}
  #allocation0 [shape = 'u32[]', space=smem, size = 0x4, offset = 0x4, fixed_abs, tag = 'smem constant byte address 0x4 - core index']
  #allocation1 [shape = 'u32[144,128]{1,0:T(1,128)}', space=vmem, size = 0x12000, scoped, tag = 'internal scratch']
  %s0 = inlined_call_operand.vmem [shape: s32[1,8,1], index: 0, kind: input, shape index: {}]
  %s1 = inlined_call_operand.vmem [shape: f32[8,256], index: 1, kind: input, shape index: {}, may-alias: {1,7}]
  %s2 = inlined_call_operand.vmem [shape: f32[8,128], index: 2, kind: input, shape index: {}]
  %s3 = inlined_call_operand.vmem [shape: bf16[128,128], index: 3, kind: input, shape index: {}]
  %s4 = inlined_call_operand.hbm [shape: bf16[128,128], index: 4, kind: input, shape index: {}]
  %s5 = inlined_call_operand.vmem [shape: f32[1,128], index: 5, kind: input, shape index: {}]
  %s6 = inlined_call_operand.vmem [shape: f32[1,8,128], index: 6, kind: output, shape index: {0}]
  %s7 = inlined_call_operand.vmem [shape: f32[8,256], index: 7, kind: output, shape index: {1}, may-alias: {1,7}]
  %8 = xla_tuple %s6, %s7
  %s9 = sld [smem:[#allocation0]]
  $region50: #{decoder_forward.1} parent=0
    _
  %s11 = ssub.s32 1, %s9
  %s12 = scalar_select 0, %s11, %s9
  $region1: #{decoder_forward.1} parent=0
    #allocation2 [shape = 'u8[32768]{0}', space=vmem, size = 0x8000, scoped, tag = 'input window, operand 4, single buffered']
    #allocation3 [shape = 's32[1]{0}', space=sflag, size = 0x4, scoped, tag = 'scoped memory for decoder_forward.1']
    %13 = vsyncpa [#allocation3], 0
    // Predicated region
    $region2: #{decoder_forward.1} parent=1 // pred_check
      _
    $region3: #{decoder_forward.1} parent=1 // pred_check_branch
      %15 = sbr.rel (0) target = $region5
    $region4: #{decoder_forward.1} parent=1 // pred_region
      _
    $region5: #{decoder_forward.1} parent=1 // pred_fallthru
      _
    // Predicated region
    $region6: #{decoder_forward.1} parent=1 // pred_check
      _
    $region7: #{decoder_forward.1} parent=1 // pred_check_branch
      %17 = sbr.rel (0) target = $region9
    $region8: #{decoder_forward.1} parent=1 // pred_region
      _
    $region9: #{decoder_forward.1} parent=1 // pred_fallthru
      _
    // Predicated region
    $region10: #{decoder_forward.1} parent=1 // pred_check
      _
    $region11: #{decoder_forward.1} parent=1 // pred_check_branch
      %19 = sbr.rel (0) target = $region13
    $region12: #{decoder_forward.1} parent=1 // pred_region
      _
    $region13: #{decoder_forward.1} parent=1 // pred_fallthru
      _
    // Predicated region
    $region14: #{decoder_forward.1} parent=1 // pred_check
      _
    $region15: #{decoder_forward.1} parent=1 // pred_check_branch
      %21 = sbr.rel (0) target = $region17
    $region16: #{decoder_forward.1} parent=1 // pred_region
      _
    $region17: #{decoder_forward.1} parent=1 // pred_fallthru
      _
    // Predicated region
    $region18: #{decoder_forward.1} parent=1 // pred_check
      _
    $region19: #{decoder_forward.1} parent=1 // pred_check_branch
      %23 = sbr.rel (0) target = $region21
    $region20: #{decoder_forward.1} parent=1 // pred_region
      %s25 = ssub.s32 1024, 1024
      %26 = vsyncadd [#allocation3], %s25
      %s27 = sshll.u32 [#allocation2], 4
      %s28 = int_to_ptr.vmem [resolvable:$true] %s27
      %33 = dma.hbm_to_vmem [thread:$0]  %s4, 1024, %s28, [#allocation3], 64, 64, 4
    $region21: #{decoder_forward.1} parent=1 // pred_fallthru
      _
    // Predicated region
    $region22: #{decoder_forward.1} parent=1 // pred_check
      _
    $region23: #{decoder_forward.1} parent=1 // pred_check_branch
      %35 = sbr.rel (0) target = $region25
    $region24: #{decoder_forward.1} parent=1 // pred_region
      _
    $region25: #{decoder_forward.1} parent=1 // pred_fallthru
      _
    // Predicated region
    $region26: #{decoder_forward.1} parent=1 // pred_check
      _
    $region27: #{decoder_forward.1} parent=1 // pred_check_branch
      %37 = sbr.rel (0) target = $region29
    $region28: #{decoder_forward.1} parent=1 // pred_region
      %38 = dma.done [#allocation3], 1024
    $region29: #{decoder_forward.1} parent=1 // pred_fallthru
      _
    %p40 = scmp.eq.s32.totalorder 0, 0
    // Predicated region
    $region30: #{decoder_forward.1} parent=1 // pred_check
      %p41 = pneg %p40
    $region31: #{decoder_forward.1} parent=1 // pred_check_branch
      %43 = sbr.rel (%p41) target = $region33
    $region32: #{decoder_forward.1} parent=1 // pred_region
      %v44 = vld [vmem:[%s1] sm:$0xff]
      %v45 = vld [vmem:[%s1 + $0x8] sm:$0xff]
      %46 = vst [vmem:[%s7] sm:$0xff] %v44
      %47 = vst [vmem:[%s7 + $0x8] sm:$0xff] %v45
    $region33: #{decoder_forward.1} parent=1 // pred_fallthru
      _
    %v48 = vld [vmem:[%s7] sm:$0xff]
    %v49 = vld [vmem:[%s7 + $0x8] sm:$0xff]
    %v50 = vld [vmem:[%s0] sm:$0xff]
    %v51 = vlaneseq
    %v52 = vand.u32 %v51, 127
    %53 = vset.pattern.permute.xlu0 0
    %54 = vperm.xlu0 %53, %v50
    %v55 = vpop.permute.xlu0 %54
    %vm56 = vcmp.eq.s32.totalorder %v52, %v55
    %v57 = vsel %vm56, 1, 0
    %v58 = vcvt.s32.f32 %v57
    %v59 = vld [vmem:[%s2] sm:$0xff]
    %v60 = vpack.c.bf16 %v48, %v48
    %v61 = vld [vmem:[%s3] sm:$0xf]
    %v62 = vld [vmem:[%s3 + $0x4] sm:$0xf]
    %v63 = vld [vmem:[%s3 + $0x8] sm:$0xf]
    %v64 = vld [vmem:[%s3 + $0xc] sm:$0xf]
    %v65 = vld [vmem:[%s3 + $0x10] sm:$0xf]
    %v66 = vld [vmem:[%s3 + $0x14] sm:$0xf]
    %v67 = vld [vmem:[%s3 + $0x18] sm:$0xf]
    %v68 = vld [vmem:[%s3 + $0x1c] sm:$0xf]
    %v69 = vld [vmem:[%s3 + $0x20] sm:$0xf]
    %v70 = vld [vmem:[%s3 + $0x24] sm:$0xf]
    %v71 = vld [vmem:[%s3 + $0x28] sm:$0xf]
    %v72 = vld [vmem:[%s3 + $0x2c] sm:$0xf]
    %v73 = vld [vmem:[%s3 + $0x30] sm:$0xf]
    %v74 = vld [vmem:[%s3 + $0x34] sm:$0xf]
    %v75 = vld [vmem:[%s3 + $0x38] sm:$0xf]
    %v76 = vld [vmem:[%s3 + $0x3c] sm:$0xf]
    %v93 = vunpack.c.l.b16 %v61
    %v94 = vunpack.c.l.b16 %v62
    %v95 = vunpack.c.l.b16 %v63
    %v96 = vunpack.c.l.b16 %v64
    %v97 = vunpack.c.l.b16 %v65
    %v98 = vunpack.c.l.b16 %v66
    %v99 = vunpack.c.l.b16 %v67
    %v100 = vunpack.c.l.b16 %v68
    %v101 = vunpack.c.l.b16 %v69
    %v102 = vunpack.c.l.b16 %v70
    %v103 = vunpack.c.l.b16 %v71
    %v104 = vunpack.c.l.b16 %v72
    %v105 = vunpack.c.l.b16 %v73
    %v106 = vunpack.c.l.b16 %v74
    %v107 = vunpack.c.l.b16 %v75
    %v108 = vunpack.c.l.b16 %v76
    %v109 = vpack.c.b16 %v94, %v93
    %v110 = vpack.c.b16 %v96, %v95
    %v111 = vpack.c.b16 %v98, %v97
    %v112 = vpack.c.b16 %v100, %v99
    %v113 = vpack.c.b16 %v102, %v101
    %v114 = vpack.c.b16 %v104, %v103
    %v115 = vpack.c.b16 %v106, %v105
    %v116 = vpack.c.b16 %v108, %v107
    %125 = vmatprep.subr.bf16.mxu0 0
    %126 = vmatpush1.bf16.msra.mxu0 %v109
    %127 = vmatprep.subr.bf16.mxu0 0
    %128 = vmatpush1.bf16.msra.mxu0 %v110
    %129 = vmatprep.subr.bf16.mxu0 0
    %130 = vmatpush1.bf16.msra.mxu0 %v111
    %131 = vmatprep.subr.bf16.mxu0 0
    %132 = vmatpush1.bf16.msra.mxu0 %v112
    %133 = vmatprep.subr.bf16.mxu0 0
    %134 = vmatpush1.bf16.msra.mxu0 %v113
    %135 = vmatprep.subr.bf16.mxu0 0
    %136 = vmatpush1.bf16.msra.mxu0 %v114
    %137 = vmatprep.subr.bf16.mxu0 0
    %138 = vmatpush1.bf16.msra.mxu0 %v115
    %139 = vmatprep.subr.bf16.mxu0 0
    %140 = vmatpush1.bf16.msra.mxu0 %v116
    %141 = vmatprep.subr.bf16.mxu0 0
    %142 = vmatpush1.bf16.msra.mxu0 0
    %143 = vmatprep.subr.bf16.mxu0 0
    %144 = vmatpush1.bf16.msra.mxu0 0
    %145 = vmatprep.subr.bf16.mxu0 0
    %146 = vmatpush1.bf16.msra.mxu0 0
    %147 = vmatprep.subr.bf16.mxu0 0
    %148 = vmatpush1.bf16.msra.mxu0 0
    %149 = vmatprep.subr.bf16.mxu0 0
    %150 = vmatpush1.bf16.msra.mxu0 0
    %151 = vmatprep.subr.bf16.mxu0 0
    %152 = vmatpush1.bf16.msra.mxu0 0
    %153 = vmatprep.subr.bf16.mxu0 0
    %154 = vmatpush1.bf16.msra.mxu0 0
    %155 = vmatprep.subr.bf16.mxu0 0
    %156 = vmatpush1.bf16.msra.mxu0 0
    %157 = vmatprep.mubr.bf16.mxu0 0
    %158 = vmatmul.mubr.bf16.gmra.mrb[0].mxu0 %v60
    %v159 = vpop.f32.mrb[0].mxu0
    %v160 = vadd.f32 0.0, %v159
    %v161 = vpop.f32.mrb[0].mxu0
    %v162 = vpop.f32.mrb[0].mxu0
    %v163 = vpop.f32.mrb[0].mxu0
    %164 = vdwg.mxu0
    %vm165 = vcmask 64512
    %v167 = vsel %vm165, %v58, 0
    %169 = vmatprep.subr.mxu0 0.0
    %170 = vmatpush1.msra.mxu0 %v59
    %171 = vmatprep.subr.mxu0 0.0
    %172 = vmatpush1.msra.mxu0 0.0
    %173 = vmatprep.subr.mxu0 0.0
    %174 = vmatpush1.msra.mxu0 0.0
    %175 = vmatprep.subr.mxu0 0.0
    %176 = vmatpush1.msra.mxu0 0.0
    %177 = vmatprep.subr.mxu0 0.0
    %178 = vmatpush1.msra.mxu0 0.0
    %179 = vmatprep.subr.mxu0 0.0
    %180 = vmatpush1.msra.mxu0 0.0
    %181 = vmatprep.subr.mxu0 0.0
    %182 = vmatpush1.msra.mxu0 0.0
    %183 = vmatprep.subr.mxu0 0.0
    %184 = vmatpush1.msra.mxu0 0.0
    %185 = vmatprep.subr.mxu0 0.0
    %186 = vmatpush1.msra.mxu0 0.0
    %187 = vmatprep.subr.mxu0 0.0
    %188 = vmatpush1.msra.mxu0 0.0
    %189 = vmatprep.subr.mxu0 0.0
    %190 = vmatpush1.msra.mxu0 0.0
    %191 = vmatprep.subr.mxu0 0.0
    %192 = vmatpush1.msra.mxu0 0.0
    %193 = vmatprep.subr.mxu0 0.0
    %194 = vmatpush1.msra.mxu0 0.0
    %195 = vmatprep.subr.mxu0 0.0
    %196 = vmatpush1.msra.mxu0 0.0
    %197 = vmatprep.subr.mxu0 0.0
    %198 = vmatpush1.msra.mxu0 0.0
    %199 = vmatprep.subr.mxu0 0.0
    %200 = vmatpush1.msra.mxu0 0.0
    %201 = vmatprep.subr.mxu0 0.0
    %202 = vmatpush1.msra.mxu0 0.0
    %203 = vmatprep.subr.mxu0 0.0
    %204 = vmatpush1.msra.mxu0 0.0
    %205 = vmatprep.subr.mxu0 0.0
    %206 = vmatpush1.msra.mxu0 0.0
    %207 = vmatprep.subr.mxu0 0.0
    %208 = vmatpush1.msra.mxu0 0.0
    %209 = vmatprep.subr.mxu0 0.0
    %210 = vmatpush1.msra.mxu0 0.0
    %211 = vmatprep.subr.mxu0 0.0
    %212 = vmatpush1.msra.mxu0 0.0
    %213 = vmatprep.subr.mxu0 0.0
    %214 = vmatpush1.msra.mxu0 0.0
    %215 = vmatprep.subr.mxu0 0.0
    %216 = vmatpush1.msra.mxu0 0.0
    %217 = vmatprep.subr.mxu0 0.0
    %218 = vmatpush1.msra.mxu0 0.0
    %219 = vmatprep.subr.mxu0 0.0
    %220 = vmatpush1.msra.mxu0 0.0
    %221 = vmatprep.subr.mxu0 0.0
    %222 = vmatpush1.msra.mxu0 0.0
    %223 = vmatprep.subr.mxu0 0.0
    %224 = vmatpush1.msra.mxu0 0.0
    %225 = vmatprep.subr.mxu0 0.0
    %226 = vmatpush1.msra.mxu0 0.0
    %227 = vmatprep.subr.mxu0 0.0
    %228 = vmatpush1.msra.mxu0 0.0
    %229 = vmatprep.subr.mxu0 0.0
    %230 = vmatpush1.msra.mxu0 0.0
    %231 = vmatprep.subr.mxu0 0.0
    %232 = vmatpush1.msra.mxu0 0.0
    %233 = vmatprep.mubr.f32.mxu0 0.0
    %234 = vmatmul.mubr.f32.gmra.mrb[0].mxu0 %v167
    %v235 = vpop.f32.mrb[0].mxu0
    %v236 = vadd.f32 %v160, %v235
    %v237 = vpop.f32.mrb[0].mxu0
    %238 = vdwg.mxu0
    %vm239 = vcmp.ge.s32.totalorder %v52, 32
    %vm240 = vcmp.lt.s32.totalorder %v52, 48
    %vm241 = vmand %vm239, %vm240
    %vm242 = vcmp.ge.s32.totalorder %v52, 96
    %vm243 = vcmp.lt.s32.totalorder %v52, 112
    %vm244 = vmand %vm242, %vm243
    %vm245 = vmor %vm241, %vm244
    %v246 = vtanh.pop %v236
    %v247 = vxor.u32 %v236, 2147483648
    %v248 = vmul.f32 %v247, 1.442695
    %v249 = vpow.pop %v248
    %v250 = vadd.f32 %v249, 1.0
    %v251 = vrcp.pop %v250
    %v252 = vmul.f32 1.0, %v251
    %v253 = vsel %vm245, %v246, %v252
    %254 = vrot.lane.b32.xlu0 %v253, 16
    %v255 = vpop.permute.xlu0 %254
    %256 = vrot.lane.b32.xlu0 %v253, 32
    %v257 = vpop.permute.xlu0 %256
    %258 = vrot.lane.b32.xlu0 %v253, 48
    %v259 = vpop.permute.xlu0 %258
    %v260 = vmul.f32 %v255, %v49
    %v261 = vmul.f32 %v253, %v257
    %v262 = vadd.f32 %v260, %v261
    %v263 = vtanh.pop %v262
    %v264 = vmul.f32 %v259, %v263
    %265 = vst [vmem:[%s7] sm:$0xff] %v264
    %266 = vst [vmem:[%s7 + $0x8] sm:$0xff] %v262
    %v267 = vpack.c.bf16 %v264, %v264
    %v268 = vld [vmem:[#allocation2] sm:$0xf]
    %v269 = vld [vmem:[#allocation2 + $0x4] sm:$0xf]
    %v270 = vld [vmem:[#allocation2 + $0x8] sm:$0xf]
    %v271 = vld [vmem:[#allocation2 + $0xc] sm:$0xf]
    %v272 = vld [vmem:[#allocation2 + $0x10] sm:$0xf]
    %v273 = vld [vmem:[#allocation2 + $0x14] sm:$0xf]
    %v274 = vld [vmem:[#allocation2 + $0x18] sm:$0xf]
    %v275 = vld [vmem:[#allocation2 + $0x1c] sm:$0xf]
    %v276 = vld [vmem:[#allocation2 + $0x20] sm:$0xf]
    %v277 = vld [vmem:[#allocation2 + $0x24] sm:$0xf]
    %v278 = vld [vmem:[#allocation2 + $0x28] sm:$0xf]
    %v279 = vld [vmem:[#allocation2 + $0x2c] sm:$0xf]
    %v280 = vld [vmem:[#allocation2 + $0x30] sm:$0xf]
    %v281 = vld [vmem:[#allocation2 + $0x34] sm:$0xf]
    %v282 = vld [vmem:[#allocation2 + $0x38] sm:$0xf]
    %v283 = vld [vmem:[#allocation2 + $0x3c] sm:$0xf]
    %v284 = vld [vmem:[%s5] sm:$0x1]
    %v286 = vlaneseq
    %v287 = vshrl.u32 %v286, 7
    %v288 = vsub.s32 0, %v287
    %v289 = vrot.slane %v284, %v288
    %v307 = vunpack.c.l.b16 %v268
    %v308 = vunpack.c.l.b16 %v269
    %v309 = vunpack.c.l.b16 %v270
    %v310 = vunpack.c.l.b16 %v271
    %v311 = vunpack.c.l.b16 %v272
    %v312 = vunpack.c.l.b16 %v273
    %v313 = vunpack.c.l.b16 %v274
    %v314 = vunpack.c.l.b16 %v275
    %v315 = vunpack.c.l.b16 %v276
    %v316 = vunpack.c.l.b16 %v277
    %v317 = vunpack.c.l.b16 %v278
    %v318 = vunpack.c.l.b16 %v279
    %v319 = vunpack.c.l.b16 %v280
    %v320 = vunpack.c.l.b16 %v281
    %v321 = vunpack.c.l.b16 %v282
    %v322 = vunpack.c.l.b16 %v283
    %v323 = vpack.c.b16 %v308, %v307
    %v324 = vpack.c.b16 %v310, %v309
    %v325 = vpack.c.b16 %v312, %v311
    %v326 = vpack.c.b16 %v314, %v313
    %v327 = vpack.c.b16 %v316, %v315
    %v328 = vpack.c.b16 %v318, %v317
    %v329 = vpack.c.b16 %v320, %v319
    %v330 = vpack.c.b16 %v322, %v321
    %339 = vmatprep.subr.bf16.mxu0 0
    %340 = vmatpush1.bf16.msra.mxu0 %v323
    %341 = vmatprep.subr.bf16.mxu0 0
    %342 = vmatpush1.bf16.msra.mxu0 %v324
    %343 = vmatprep.subr.bf16.mxu0 0
    %344 = vmatpush1.bf16.msra.mxu0 %v325
    %345 = vmatprep.subr.bf16.mxu0 0
    %346 = vmatpush1.bf16.msra.mxu0 %v326
    %347 = vmatprep.subr.bf16.mxu0 0
    %348 = vmatpush1.bf16.msra.mxu0 %v327
    %349 = vmatprep.subr.bf16.mxu0 0
    %350 = vmatpush1.bf16.msra.mxu0 %v328
    %351 = vmatprep.subr.bf16.mxu0 0
    %352 = vmatpush1.bf16.msra.mxu0 %v329
    %353 = vmatprep.subr.bf16.mxu0 0
    %354 = vmatpush1.bf16.msra.mxu0 %v330
    %355 = vmatprep.subr.bf16.mxu0 0
    %356 = vmatpush1.bf16.msra.mxu0 0
    %357 = vmatprep.subr.bf16.mxu0 0
    %358 = vmatpush1.bf16.msra.mxu0 0
    %359 = vmatprep.subr.bf16.mxu0 0
    %360 = vmatpush1.bf16.msra.mxu0 0
    %361 = vmatprep.subr.bf16.mxu0 0
    %362 = vmatpush1.bf16.msra.mxu0 0
    %363 = vmatprep.subr.bf16.mxu0 0
    %364 = vmatpush1.bf16.msra.mxu0 0
    %365 = vmatprep.subr.bf16.mxu0 0
    %366 = vmatpush1.bf16.msra.mxu0 0
    %367 = vmatprep.subr.bf16.mxu0 0
    %368 = vmatpush1.bf16.msra.mxu0 0
    %369 = vmatprep.subr.bf16.mxu0 0
    %370 = vmatpush1.bf16.msra.mxu0 0
    %371 = vmatprep.mubr.bf16.mxu0 0
    %372 = vmatmul.mubr.bf16.gmra.mrb[0].mxu0 %v267
    %v373 = vpop.f32.mrb[0].mxu0
    %v374 = vadd.f32 %v289, %v373
    %v375 = vpop.f32.mrb[0].mxu0
    %v376 = vpop.f32.mrb[0].mxu0
    %v377 = vpop.f32.mrb[0].mxu0
    %378 = vdwg.mxu0
    %379 = vst [vmem:[%s6] sm:$0xff] %v374
    // Predicated region
    $region34: #{decoder_forward.1} parent=1 // pred_check
      _
    $region35: #{decoder_forward.1} parent=1 // pred_check_branch
      %381 = sbr.rel (0) target = $region37
    $region36: #{decoder_forward.1} parent=1 // pred_region
      _
    $region37: #{decoder_forward.1} parent=1 // pred_fallthru
      _
    // Predicated region
    $region38: #{decoder_forward.1} parent=1 // pred_check
      _
    $region39: #{decoder_forward.1} parent=1 // pred_check_branch
      %383 = sbr.rel (0) target = $region41
    $region40: #{decoder_forward.1} parent=1 // pred_region
      _
    $region41: #{decoder_forward.1} parent=1 // pred_fallthru
      _
    // Predicated region
    $region42: #{decoder_forward.1} parent=1 // pred_check
      _
    $region43: #{decoder_forward.1} parent=1 // pred_check_branch
      %385 = sbr.rel (0) target = $region45
    $region44: #{decoder_forward.1} parent=1 // pred_region
      _
    $region45: #{decoder_forward.1} parent=1 // pred_fallthru
      _
    // Predicated region
    $region46: #{decoder_forward.1} parent=1 // pred_check
      _
    $region47: #{decoder_forward.1} parent=1 // pred_check_branch
      %387 = sbr.rel (0) target = $region49
    $region48: #{decoder_forward.1} parent=1 // pred_region
      _
    $region49: #{decoder_forward.1} parent=1 // pred_fallthru
      _
    %388 = vsyncpa [#allocation3], 1

</llo_original>
